<compile_context>
chip_gen: v7x
topology: tpu7x:2x2x1
jax: 0.10.0
libtpu: 0.0.40
codegen_flags: <defaults>
</compile_context>

<pallas_src>
import jax
import jax.numpy as jnp
from jax.experimental import pallas as pl
from jax.experimental.pallas import tpu as pltpu

LANE = 128      # TPU lane width: hidden/output feature dims padded to this.
SUBLANE = 16    # bf16 sublane packing: batch tiles are multiples of this.
TB_MAX = 1024   # tile sweep: 256->63%, 512->85%, 1024->86% of HBM roofline.


def _round_up(n, m):
    return ((n + m - 1) // m) * m


def _pick_tb(batch, *, tb_max=TB_MAX, sublane=SUBLANE, min_steps=8, pad_frac=0.10):
    """Pick the batch tile.

    As large as possible (amortize the ~0.35us fixed per-grid-step cost),
    capped so that (a) it never exceeds tb_max, (b) large batches keep at
    least `min_steps` grid steps (>= 4 per TensorCore on v7x dual-TC, keeps
    the DMA pipeline primed), and (c) ragged batches don't waste more than
    ~pad_frac of their rows on padding.
    """
    b16 = _round_up(max(batch, 1), sublane)
    cap = min(tb_max, b16)
    if b16 >= min_steps * 256:           # only split when tiles stay >= 256 rows
        cap = min(cap, _round_up(pl.cdiv(b16, min_steps), sublane))
    n = pl.cdiv(b16, cap)
    while True:
        tb = min(cap, _round_up(pl.cdiv(b16, n), sublane))
        pad = _round_up(b16, tb) - b16
        if pad <= pad_frac * b16 or tb <= 2 * sublane:
            return tb
        n += 1


def _mlp_kernel(x_ref, w1_ref, b1_ref, w2_ref, b2_ref, o_ref):
    # Layer 1: x arrives unpadded (K = in_dim) in f32; cast to bf16 in-register
    # and accumulate in f32 on the MXU.  K=32 is cheap: the MXU has huge slack
    # here (the kernel is HBM-bound).
    x = x_ref[...].astype(jnp.bfloat16)
    h = jnp.dot(x, w1_ref[...], preferred_element_type=jnp.float32)
    h = jnp.maximum(h + b1_ref[...], 0.0)            # bias broadcast + ReLU (VPU)
    # Layer 2: feed the second MXU pass in bf16 directly (no explicit VMEM
    # scratch round-trip; Mosaic keeps it in vregs / compiler-managed VMEM).
    y = jnp.dot(h.astype(jnp.bfloat16), w2_ref[...],
                preferred_element_type=jnp.float32)
    # bf16 output: halves the dominant HBM writeback stream (128 padded lanes).
    o_ref[...] = (y + b2_ref[...]).astype(o_ref.dtype)


def _mlp_pallas(x_p, w1_p, b1_p, w2_p, b2_p, *, tb):
    batch_p, in_dim = x_p.shape
    hid_p = w1_p.shape[1]
    out_p = w2_p.shape[1]
    grid = (batch_p // tb,)
    return pl.pallas_call(
        _mlp_kernel,
        out_shape=jax.ShapeDtypeStruct((batch_p, out_p), jnp.bfloat16),
        grid=grid,
        in_specs=[
            # x tile marches over the batch; last dim = full array dim (32),
            # so no lane padding of x is needed (legal full-extent block).
            pl.BlockSpec((tb, in_dim), lambda i: (i, 0)),
            pl.BlockSpec((in_dim, hid_p), lambda i: (0, 0)),  # W1 resident in VMEM
            pl.BlockSpec((1, hid_p), lambda i: (0, 0)),       # b1 resident
            pl.BlockSpec((hid_p, out_p), lambda i: (0, 0)),   # W2 resident
            pl.BlockSpec((1, out_p), lambda i: (0, 0)),       # b2 resident
        ],
        # Lane-dense (128-wide) bf16 output tile -> unmasked vst.
        out_specs=pl.BlockSpec((tb, out_p), lambda i: (i, 0)),
        compiler_params=pltpu.CompilerParams(
            # Batch tiles are independent -> shard across both TensorCores on
            # v7x (harmless on single-TC v5e/v6e).
            dimension_semantics=("parallel",),
        ),
    )(x_p, w1_p, b1_p, w2_p, b2_p)


def prepare_params(params):
    """Pad feature dims to the 128-lane width and cast matmul operands to bf16.

    Done once (the padded weights total ~25 KB); W1's input dim stays unpadded
    to match the unpadded x the kernel receives.
    """
    w1, b1, w2, b2 = params
    in_dim, hidden = w1.shape
    out_dim = w2.shape[1]
    hid_p = _round_up(hidden, LANE)
    out_p = _round_up(out_dim, LANE)
    w1_p = jnp.pad(w1, ((0, 0), (0, hid_p - hidden))).astype(jnp.bfloat16)
    b1_p = jnp.pad(b1, ((0, 0), (0, hid_p - hidden))).astype(jnp.float32)
    w2_p = jnp.pad(w2, ((0, hid_p - hidden), (0, out_p - out_dim))).astype(jnp.bfloat16)
    b2_p = jnp.pad(b2, ((0, 0), (0, out_p - out_dim))).astype(jnp.float32)
    return (w1_p, b1_p, w2_p, b2_p, out_dim)


def checkpoint_module_forward(x, prepared):
    """Forward of CheckpointModule(Sequential(Linear, ReLU, Linear), num_segments=1).

    checkpoint() leaves forward values unchanged, so this is exactly the
    wrapped MLP, fused into one Pallas kernel.
    # TODO(synk): for training, wrap the kernel in jax.custom_vjp whose backward
    # re-runs this forward kernel (true gradient checkpointing); pallas_call has
    # no autodiff rule, so jax.checkpoint alone would fail under jax.grad.
    """
    w1_p, b1_p, w2_p, b2_p, out_dim = prepared
    batch, _ = x.shape

    tb = _pick_tb(batch)
    batch_p = _round_up(_round_up(batch, SUBLANE), tb)
    # Only pad batch rows (and only when ragged); x keeps its f32 dtype and its
    # 32-wide feature axis so no padded/cast copy of x hits HBM.
    if batch_p != batch:
        x = jnp.pad(x, ((0, batch_p - batch), (0, 0)))

    y_p = _mlp_pallas(x, w1_p, b1_p, w2_p, b2_p, tb=tb)
    # Consumer-side un-pad + cast back to the module's f32 output; in a fused
    # consumer this slice/cast can be absorbed into the next op.
    return y_p[:batch, :out_dim].astype(jnp.float32)


def make_params(in_dim=32, hidden=64, out_dim=32, dtype=jnp.float32):
    """Deterministic synthetic parameters (no checkpoint files)."""
    key = jax.random.PRNGKey(0)
    k1, k2, k3, k4 = jax.random.split(key, 4)
    # Match nn.Linear default init scale: U(-1/sqrt(fan_in), 1/sqrt(fan_in)).
    s1 = 1.0 / jnp.sqrt(in_dim)
    s2 = 1.0 / jnp.sqrt(hidden)
    w1 = jax.random.uniform(k1, (in_dim, hidden), dtype, minval=-s1, maxval=s1)
    b1 = jax.random.uniform(k2, (1, hidden), dtype, minval=-s1, maxval=s1)
    w2 = jax.random.uniform(k3, (hidden, out_dim), dtype, minval=-s2, maxval=s2)
    b2 = jax.random.uniform(k4, (1, out_dim), dtype, minval=-s2, maxval=s2)
    return w1, b1, w2, b2


def _references(x, params):
    """Pure-JAX references: bf16-faithful (same operand/output rounding as the
    kernel, f32 accumulation) and full-f32."""
    w1, b1, w2, b2 = params
    # bf16-faithful
    xb = x.astype(jnp.bfloat16).astype(jnp.float32)
    w1b = w1.astype(jnp.bfloat16).astype(jnp.float32)
    w2b = w2.astype(jnp.bfloat16).astype(jnp.float32)
    h = jnp.maximum(jnp.dot(xb, w1b, precision="highest") + b1, 0.0)
    hb = h.astype(jnp.bfloat16).astype(jnp.float32)
    ref_bf16 = (jnp.dot(hb, w2b, precision="highest") + b2
                ).astype(jnp.bfloat16).astype(jnp.float32)
    # full-f32
    hf = jnp.maximum(jnp.dot(x, w1, precision="highest") + b1, 0.0)
    ref_f32 = jnp.dot(hf, w2, precision="highest") + b2
    return ref_bf16, ref_f32


if __name__ == "__main__":
    in_dim, hidden, out_dim = 32, 64, 32
    params = make_params(in_dim, hidden, out_dim)
    prepared = prepare_params(params)
    key = jax.random.PRNGKey(0)

    # batch=8: single small tile; batch=300: ragged (non-multiple of 16) batch;
    # batch=2080: multi-step grid (tb=272, grid=(8,)) with row padding.
    for batch in (8, 300, 2080):
        kx = jax.random.fold_in(key, batch)
        x = jax.random.normal(kx, (batch, in_dim), jnp.float32)

        y = jax.block_until_ready(checkpoint_module_forward(x, prepared))
        assert y.shape == (batch, out_dim), (y.shape, (batch, out_dim))
        assert y.dtype == jnp.float32

        ref_bf16, ref_f32 = _references(x, params)
        # Kernel vs. bf16-faithful reference: only MXU accumulation order and
        # <=1 ulp of final bf16 rounding may differ.
        assert jnp.allclose(y, ref_bf16, atol=2e-2, rtol=2e-2), (
            float(jnp.max(jnp.abs(y - ref_bf16))))
        # Kernel vs. full-f32 module forward: bounded bf16 operand/output error.
        assert jnp.allclose(y, ref_f32, atol=6e-2, rtol=6e-2), (
            float(jnp.max(jnp.abs(y - ref_f32))))

    print("KERNEL_OK")
</pallas_src>

<mosaic_0001>
module attributes {stable_mosaic.version = 11 : i64} {
  func.func @_mlp_kernel(%arg0: i32, %arg1: memref<16x32xf32, #tpu.memory_space<vmem>>, %arg2: memref<32x128xbf16, #tpu.memory_space<vmem>>, %arg3: memref<1x128xf32, #tpu.memory_space<vmem>>, %arg4: memref<128x128xbf16, #tpu.memory_space<vmem>>, %arg5: memref<1x128xf32, #tpu.memory_space<vmem>>, %arg6: memref<16x128xbf16, #tpu.memory_space<vmem>>) attributes {dimension_semantics = [#tpu.dimension_semantics<parallel>], iteration_bounds = array<i64: 1>, scalar_prefetch = 0 : i64, scratch_operands = 0 : i64, tpu.core_type = #tpu.core_type<tc>, window_params = [{transform_indices = @transform_0, window_bounds = array<i64: 16, 32>}, {pipeline_mode = #tpu.pipeline_mode<synchronous>, transform_indices = @transform_1, window_bounds = array<i64: 32, 128>}, {pipeline_mode = #tpu.pipeline_mode<synchronous>, transform_indices = @transform_2, window_bounds = array<i64: 1, 128>}, {pipeline_mode = #tpu.pipeline_mode<synchronous>, transform_indices = @transform_3, window_bounds = array<i64: 128, 128>}, {pipeline_mode = #tpu.pipeline_mode<synchronous>, transform_indices = @transform_4, window_bounds = array<i64: 1, 128>}, {transform_indices = @transform_5, window_bounds = array<i64: 16, 128>}]} {
    %c0 = arith.constant 0 : index
    %c0_0 = arith.constant 0 : index
    %0 = vector.load %arg1[%c0, %c0_0] : memref<16x32xf32, #tpu.memory_space<vmem>>, vector<16x32xf32>
    %1 = arith.truncf %0 : vector<16x32xf32> to vector<16x32xbf16>
    %c0_1 = arith.constant 0 : index
    %c0_2 = arith.constant 0 : index
    %2 = vector.load %arg2[%c0_1, %c0_2] : memref<32x128xbf16, #tpu.memory_space<vmem>>, vector<32x128xbf16>
    %cst = arith.constant dense<0.000000e+00> : vector<16x128xf32>
    %3 = tpu.matmul %1, %2, %cst {dimension_numbers = #tpu.dot_dimension_numbers<[1], [0], [0], [1], [0, 0, 1, 1], [], []>} : vector<16x32xbf16>, vector<32x128xbf16>, vector<16x128xf32> -> vector<16x128xf32>
    %c0_3 = arith.constant 0 : index
    %c0_4 = arith.constant 0 : index
    %4 = vector.load %arg3[%c0_3, %c0_4] : memref<1x128xf32, #tpu.memory_space<vmem>>, vector<1x128xf32>
    %5 = vector.broadcast %4 : vector<1x128xf32> to vector<16x128xf32>
    %6 = arith.addf %3, %5 : vector<16x128xf32>
    %cst_5 = arith.constant 0.000000e+00 : f32
    %7 = vector.broadcast %cst_5 : f32 to vector<16x128xf32>
    %8 = arith.maximumf %6, %7 : vector<16x128xf32>
    %9 = arith.truncf %8 : vector<16x128xf32> to vector<16x128xbf16>
    %c0_6 = arith.constant 0 : index
    %c0_7 = arith.constant 0 : index
    %10 = vector.load %arg4[%c0_6, %c0_7] : memref<128x128xbf16, #tpu.memory_space<vmem>>, vector<128x128xbf16>
    %cst_8 = arith.constant dense<0.000000e+00> : vector<16x128xf32>
    %11 = tpu.matmul %9, %10, %cst_8 {dimension_numbers = #tpu.dot_dimension_numbers<[1], [0], [0], [1], [0, 0, 1, 1], [], []>} : vector<16x128xbf16>, vector<128x128xbf16>, vector<16x128xf32> -> vector<16x128xf32>
    %c0_9 = arith.constant 0 : index
    %c0_10 = arith.constant 0 : index
    %12 = vector.load %arg5[%c0_9, %c0_10] : memref<1x128xf32, #tpu.memory_space<vmem>>, vector<1x128xf32>
    %13 = vector.broadcast %12 : vector<1x128xf32> to vector<16x128xf32>
    %14 = arith.addf %11, %13 : vector<16x128xf32>
    %15 = arith.truncf %14 : vector<16x128xf32> to vector<16x128xbf16>
    %c0_11 = arith.constant 0 : index
    %c0_12 = arith.constant 0 : index
    %16 = vector.load %arg6[%c0_11, %c0_12] : memref<16x128xbf16, #tpu.memory_space<vmem>>, vector<16x128xbf16>
    tpu.vector_store %arg6[%c0_11, %c0_12], %15 {strides = array<i32>} : memref<16x128xbf16, #tpu.memory_space<vmem>>, vector<16x128xbf16>,
    return
  }
  func.func @transform_0(%arg0: i32) -> (i32, i32) {
    %c0_i32 = arith.constant 0 : i32
    %c0_i32_0 = arith.constant 0 : i32
    return %arg0, %c0_i32 : i32, i32
  }
  func.func @transform_1(%arg0: i32) -> (i32, i32) {
    %c0_i32 = arith.constant 0 : i32
    %c0_i32_0 = arith.constant 0 : i32
    %c0_i32_1 = arith.constant 0 : i32
    return %c0_i32, %c0_i32_0 : i32, i32
  }
  func.func @transform_2(%arg0: i32) -> (i32, i32) {
    %c0_i32 = arith.constant 0 : i32
    %c0_i32_0 = arith.constant 0 : i32
    %c0_i32_1 = arith.constant 0 : i32
    return %c0_i32, %c0_i32_0 : i32, i32
  }
  func.func @transform_3(%arg0: i32) -> (i32, i32) {
    %c0_i32 = arith.constant 0 : i32
    %c0_i32_0 = arith.constant 0 : i32
    %c0_i32_1 = arith.constant 0 : i32
    return %c0_i32, %c0_i32_0 : i32, i32
  }
  func.func @transform_4(%arg0: i32) -> (i32, i32) {
    %c0_i32 = arith.constant 0 : i32
    %c0_i32_0 = arith.constant 0 : i32
    %c0_i32_1 = arith.constant 0 : i32
    return %c0_i32, %c0_i32_0 : i32, i32
  }
  func.func @transform_5(%arg0: i32) -> (i32, i32) {
    %c0_i32 = arith.constant 0 : i32
    %c0_i32_0 = arith.constant 0 : i32
    return %arg0, %c0_i32 : i32, i32
  }
}

</mosaic_0001>

<llo_original>
// kernel: tpu_custom_call.1
$region0: #{tpu_custom_call.1}
  #allocation0 [shape = 'u32[]', space=smem, size = 0x4, offset = 0x4, fixed_abs, tag = 'smem constant byte address 0x4 - core index']
  #allocation1 [shape = 'u32[144,128]{1,0:T(1,128)}', space=vmem, size = 0x12000, scoped, tag = 'internal scratch']
  %s0 = inlined_call_operand.hbm [shape: f32[16,32], index: 0, kind: input, shape index: {}]
  %s1 = inlined_call_operand.hbm [shape: bf16[32,128], index: 1, kind: input, shape index: {}]
  %s2 = inlined_call_operand.vmem [shape: f32[1,128], index: 2, kind: input, shape index: {}]
  %s3 = inlined_call_operand.hbm [shape: bf16[128,128], index: 3, kind: input, shape index: {}]
  %s4 = inlined_call_operand.vmem [shape: f32[1,128], index: 4, kind: input, shape index: {}]
  %s5 = inlined_call_operand.hbm [shape: bf16[16,128], index: 5, kind: output, shape index: {}]
  %s6 = sld [smem:[#allocation0]]
  $region42: #{tpu_custom_call.1} parent=0
    _
  %s8 = ssub.s32 1, %s6
  %s9 = scalar_select 0, %s8, %s6
  $region1: #{tpu_custom_call.1} parent=0
    #allocation2 [shape = 'u8[8192]{0}', space=vmem, size = 0x2000, scoped, tag = 'input window, operand 0, single buffered']
    #allocation3 [shape = 's32[1]{0}', space=sflag, size = 0x4, scoped, tag = 'scoped memory for tpu_custom_call.1']
    #allocation4 [shape = 's32[1]{0}', space=sflag, size = 0x4, scoped, tag = 'scoped memory for tpu_custom_call.1']
    #allocation5 [shape = 'u8[8192]{0}', space=vmem, size = 0x2000, scoped, tag = 'input window, operand 1, single buffered']
    #allocation6 [shape = 's32[1]{0}', space=sflag, size = 0x4, scoped, tag = 'scoped memory for tpu_custom_call.1']
    #allocation7 [shape = 'u8[32768]{0}', space=vmem, size = 0x8000, scoped, tag = 'input window, operand 3, single buffered']
    #allocation8 [shape = 'u8[4096]{0}', space=vmem, size = 0x1000, scoped, tag = 'output window, operand 0, single buffered']
    %10 = vsyncpa [#allocation3], 0
    %11 = vsyncpa [#allocation6], 0
    %12 = vsyncpa [#allocation4], 0
    // Predicated region
    $region2: #{tpu_custom_call.1} parent=1 // pred_check
      _
    $region3: #{tpu_custom_call.1} parent=1 // pred_check_branch
      %14 = sbr.rel (0) target = $region5
    $region4: #{tpu_custom_call.1} parent=1 // pred_region
      %s16 = ssub.s32 256, 256
      %17 = vsyncadd [#allocation3], %s16
      %s18 = sshll.u32 [#allocation2], 4
      %s19 = int_to_ptr.vmem [resolvable:$true] %s18
      %24 = dma.hbm_to_vmem [thread:$0]  %s0, 256, %s19, [#allocation3], 128, 128, 8
    $region5: #{tpu_custom_call.1} parent=1 // pred_fallthru
      _
    // Predicated region
    $region6: #{tpu_custom_call.1} parent=1 // pred_check
      _
    $region7: #{tpu_custom_call.1} parent=1 // pred_check_branch
      %26 = sbr.rel (0) target = $region9
    $region8: #{tpu_custom_call.1} parent=1 // pred_region
      %s28 = ssub.s32 256, 256
      %29 = vsyncadd [#allocation6], %s28
      %s30 = sshll.u32 [#allocation5], 4
      %s31 = int_to_ptr.vmem [resolvable:$true] %s30
      %36 = dma.hbm_to_vmem [thread:$0]  %s1, 256, %s31, [#allocation6], 64, 64, 4
    $region9: #{tpu_custom_call.1} parent=1 // pred_fallthru
      _
    // Predicated region
    $region10: #{tpu_custom_call.1} parent=1 // pred_check
      _
    $region11: #{tpu_custom_call.1} parent=1 // pred_check_branch
      %38 = sbr.rel (0) target = $region13
    $region12: #{tpu_custom_call.1} parent=1 // pred_region
      _
    $region13: #{tpu_custom_call.1} parent=1 // pred_fallthru
      _
    // Predicated region
    $region14: #{tpu_custom_call.1} parent=1 // pred_check
      _
    $region15: #{tpu_custom_call.1} parent=1 // pred_check_branch
      %40 = sbr.rel (0) target = $region17
    $region16: #{tpu_custom_call.1} parent=1 // pred_region
      %s42 = ssub.s32 1024, 1024
      %43 = vsyncadd [#allocation6], %s42
      %s44 = sshll.u32 [#allocation7], 4
      %s45 = int_to_ptr.vmem [resolvable:$true] %s44
      %50 = dma.hbm_to_vmem [thread:$0]  %s3, 1024, %s45, [#allocation6], 64, 64, 4
    $region17: #{tpu_custom_call.1} parent=1 // pred_fallthru
      _
    // Predicated region
    $region18: #{tpu_custom_call.1} parent=1 // pred_check
      _
    $region19: #{tpu_custom_call.1} parent=1 // pred_check_branch
      %52 = sbr.rel (0) target = $region21
    $region20: #{tpu_custom_call.1} parent=1 // pred_region
      _
    $region21: #{tpu_custom_call.1} parent=1 // pred_fallthru
      _
    // Predicated region
    $region22: #{tpu_custom_call.1} parent=1 // pred_check
      _
    $region23: #{tpu_custom_call.1} parent=1 // pred_check_branch
      %54 = sbr.rel (0) target = $region25
    $region24: #{tpu_custom_call.1} parent=1 // pred_region
      %55 = dma.done [#allocation3], 256
    $region25: #{tpu_custom_call.1} parent=1 // pred_fallthru
      _
    // Predicated region
    $region26: #{tpu_custom_call.1} parent=1 // pred_check
      _
    $region27: #{tpu_custom_call.1} parent=1 // pred_check_branch
      %57 = sbr.rel (0) target = $region29
    $region28: #{tpu_custom_call.1} parent=1 // pred_region
      %58 = dma.done [#allocation6], 256
    $region29: #{tpu_custom_call.1} parent=1 // pred_fallthru
      _
    // Predicated region
    $region30: #{tpu_custom_call.1} parent=1 // pred_check
      _
    $region31: #{tpu_custom_call.1} parent=1 // pred_check_branch
      %60 = sbr.rel (0) target = $region33
    $region32: #{tpu_custom_call.1} parent=1 // pred_region
      %61 = dma.done [#allocation6], 1024
    $region33: #{tpu_custom_call.1} parent=1 // pred_fallthru
      _
    %v63 = vld [vmem:[#allocation2] sm:$0xff]
    %v64 = vld [vmem:[#allocation2 + $0x8] sm:$0xff]
    %v65 = vpack.c.bf16 %v64, %v63
    %v66 = vld [vmem:[#allocation5] sm:$0xf]
    %v67 = vld [vmem:[#allocation5 + $0x4] sm:$0xf]
    %v68 = vld [vmem:[#allocation5 + $0x8] sm:$0xf]
    %v69 = vld [vmem:[#allocation5 + $0xc] sm:$0xf]
    %v70 = vld [vmem:[%s2] sm:$0x1]
    %v72 = vlaneseq
    %v73 = vshrl.u32 %v72, 7
    %v74 = vsub.s32 0, %v73
    %v75 = vrot.slane %v70, %v74
    %v81 = vunpack.c.l.b16 %v66
    %v82 = vunpack.c.l.b16 %v67
    %v83 = vunpack.c.l.b16 %v68
    %v84 = vunpack.c.l.b16 %v69
    %v85 = vpack.c.b16 %v82, %v81
    %v86 = vpack.c.b16 %v84, %v83
    %vm89 = vcmask 261120
    %v91 = vsel %vm89, %v65, 0
    %93 = vmatprep.subr.bf16.mxu0 0
    %94 = vmatpush1.bf16.msra.mxu0 %v85
    %95 = vmatprep.subr.bf16.mxu0 0
    %96 = vmatpush1.bf16.msra.mxu0 %v86
    %97 = vmatprep.subr.bf16.mxu0 0
    %98 = vmatpush1.bf16.msra.mxu0 0
    %99 = vmatprep.subr.bf16.mxu0 0
    %100 = vmatpush1.bf16.msra.mxu0 0
    %101 = vmatprep.subr.bf16.mxu0 0
    %102 = vmatpush1.bf16.msra.mxu0 0
    %103 = vmatprep.subr.bf16.mxu0 0
    %104 = vmatpush1.bf16.msra.mxu0 0
    %105 = vmatprep.subr.bf16.mxu0 0
    %106 = vmatpush1.bf16.msra.mxu0 0
    %107 = vmatprep.subr.bf16.mxu0 0
    %108 = vmatpush1.bf16.msra.mxu0 0
    %109 = vmatprep.subr.bf16.mxu0 0
    %110 = vmatpush1.bf16.msra.mxu0 0
    %111 = vmatprep.subr.bf16.mxu0 0
    %112 = vmatpush1.bf16.msra.mxu0 0
    %113 = vmatprep.subr.bf16.mxu0 0
    %114 = vmatpush1.bf16.msra.mxu0 0
    %115 = vmatprep.subr.bf16.mxu0 0
    %116 = vmatpush1.bf16.msra.mxu0 0
    %117 = vmatprep.subr.bf16.mxu0 0
    %118 = vmatpush1.bf16.msra.mxu0 0
    %119 = vmatprep.subr.bf16.mxu0 0
    %120 = vmatpush1.bf16.msra.mxu0 0
    %121 = vmatprep.subr.bf16.mxu0 0
    %122 = vmatpush1.bf16.msra.mxu0 0
    %123 = vmatprep.subr.bf16.mxu0 0
    %124 = vmatpush1.bf16.msra.mxu0 0
    %125 = vmatprep.mubr.bf16.mxu0 0
    %126 = vmatmul.mubr.bf16.gmra.mrb[0].mxu0 %v91
    %v127 = vpop.f32.mrb[0].mxu0
    %v128 = vadd.f32 %v75, %v127
    %v129 = vpop.f32.mrb[0].mxu0
    %v130 = vpop.f32.mrb[0].mxu0
    %v131 = vadd.f32 %v75, %v130
    %v132 = vpop.f32.mrb[0].mxu0
    %133 = vdwg.mxu0
    %v134 = vmax.f32 %v128, 0.0
    %v135 = vmax.f32 %v131, 0.0
    %v136 = vpack.c.bf16 %v135, %v134
    %v137 = vld [vmem:[#allocation7] sm:$0xf]
    %v138 = vld [vmem:[#allocation7 + $0x4] sm:$0xf]
    %v139 = vld [vmem:[#allocation7 + $0x8] sm:$0xf]
    %v140 = vld [vmem:[#allocation7 + $0xc] sm:$0xf]
    %v141 = vld [vmem:[#allocation7 + $0x10] sm:$0xf]
    %v142 = vld [vmem:[#allocation7 + $0x14] sm:$0xf]
    %v143 = vld [vmem:[#allocation7 + $0x18] sm:$0xf]
    %v144 = vld [vmem:[#allocation7 + $0x1c] sm:$0xf]
    %v145 = vld [vmem:[#allocation7 + $0x20] sm:$0xf]
    %v146 = vld [vmem:[#allocation7 + $0x24] sm:$0xf]
    %v147 = vld [vmem:[#allocation7 + $0x28] sm:$0xf]
    %v148 = vld [vmem:[#allocation7 + $0x2c] sm:$0xf]
    %v149 = vld [vmem:[#allocation7 + $0x30] sm:$0xf]
    %v150 = vld [vmem:[#allocation7 + $0x34] sm:$0xf]
    %v151 = vld [vmem:[#allocation7 + $0x38] sm:$0xf]
    %v152 = vld [vmem:[#allocation7 + $0x3c] sm:$0xf]
    %v153 = vld [vmem:[%s4] sm:$0x1]
    %v155 = vlaneseq
    %v156 = vshrl.u32 %v155, 7
    %v157 = vsub.s32 0, %v156
    %v158 = vrot.slane %v153, %v157
    %v176 = vunpack.c.l.b16 %v137
    %v177 = vunpack.c.l.b16 %v138
    %v178 = vunpack.c.l.b16 %v139
    %v179 = vunpack.c.l.b16 %v140
    %v180 = vunpack.c.l.b16 %v141
    %v181 = vunpack.c.l.b16 %v142
    %v182 = vunpack.c.l.b16 %v143
    %v183 = vunpack.c.l.b16 %v144
    %v184 = vunpack.c.l.b16 %v145
    %v185 = vunpack.c.l.b16 %v146
    %v186 = vunpack.c.l.b16 %v147
    %v187 = vunpack.c.l.b16 %v148
    %v188 = vunpack.c.l.b16 %v149
    %v189 = vunpack.c.l.b16 %v150
    %v190 = vunpack.c.l.b16 %v151
    %v191 = vunpack.c.l.b16 %v152
    %v192 = vpack.c.b16 %v177, %v176
    %v193 = vpack.c.b16 %v179, %v178
    %v194 = vpack.c.b16 %v181, %v180
    %v195 = vpack.c.b16 %v183, %v182
    %v196 = vpack.c.b16 %v185, %v184
    %v197 = vpack.c.b16 %v187, %v186
    %v198 = vpack.c.b16 %v189, %v188
    %v199 = vpack.c.b16 %v191, %v190
    %208 = vmatprep.subr.bf16.mxu0 0
    %209 = vmatpush1.bf16.msra.mxu0 %v192
    %210 = vmatprep.subr.bf16.mxu0 0
    %211 = vmatpush1.bf16.msra.mxu0 %v193
    %212 = vmatprep.subr.bf16.mxu0 0
    %213 = vmatpush1.bf16.msra.mxu0 %v194
    %214 = vmatprep.subr.bf16.mxu0 0
    %215 = vmatpush1.bf16.msra.mxu0 %v195
    %216 = vmatprep.subr.bf16.mxu0 0
    %217 = vmatpush1.bf16.msra.mxu0 %v196
    %218 = vmatprep.subr.bf16.mxu0 0
    %219 = vmatpush1.bf16.msra.mxu0 %v197
    %220 = vmatprep.subr.bf16.mxu0 0
    %221 = vmatpush1.bf16.msra.mxu0 %v198
    %222 = vmatprep.subr.bf16.mxu0 0
    %223 = vmatpush1.bf16.msra.mxu0 %v199
    %224 = vmatprep.subr.bf16.mxu0 0
    %225 = vmatpush1.bf16.msra.mxu0 0
    %226 = vmatprep.subr.bf16.mxu0 0
    %227 = vmatpush1.bf16.msra.mxu0 0
    %228 = vmatprep.subr.bf16.mxu0 0
    %229 = vmatpush1.bf16.msra.mxu0 0
    %230 = vmatprep.subr.bf16.mxu0 0
    %231 = vmatpush1.bf16.msra.mxu0 0
    %232 = vmatprep.subr.bf16.mxu0 0
    %233 = vmatpush1.bf16.msra.mxu0 0
    %234 = vmatprep.subr.bf16.mxu0 0
    %235 = vmatpush1.bf16.msra.mxu0 0
    %236 = vmatprep.subr.bf16.mxu0 0
    %237 = vmatpush1.bf16.msra.mxu0 0
    %238 = vmatprep.subr.bf16.mxu0 0
    %239 = vmatpush1.bf16.msra.mxu0 0
    %240 = vmatprep.mubr.bf16.mxu0 0
    %241 = vmatmul.mubr.bf16.gmra.mrb[0].mxu0 %v136
    %v242 = vpop.f32.mrb[0].mxu0
    %v243 = vadd.f32 %v158, %v242
    %v244 = vpop.f32.mrb[0].mxu0
    %v245 = vpop.f32.mrb[0].mxu0
    %v246 = vadd.f32 %v158, %v245
    %v247 = vpop.f32.mrb[0].mxu0
    %248 = vdwg.mxu0
    %v249 = vpack.c.bf16 %v246, %v243
    %v251 = vunpack.c.l.b16 %v249
    %v252 = vunpack.c.h.b16 %v249
    %v253 = vpack.c.b16 %v251, %v251
    %v254 = vpack.c.b16 %v252, %v252
    %257 = vst [vmem:[#allocation8] sm:$0xf] %v253
    %258 = vst [vmem:[#allocation8 + $0x4] sm:$0xf] %v254
    // Predicated region
    $region34: #{tpu_custom_call.1} parent=1 // pred_check
      _
    $region35: #{tpu_custom_call.1} parent=1 // pred_check_branch
      %260 = sbr.rel (0) target = $region37
    $region36: #{tpu_custom_call.1} parent=1 // pred_region
      %s262 = ssub.s32 128, 128
      %263 = vsyncadd [#allocation4], %s262
      %s264 = sshll.u32 [#allocation8], 4
      %s265 = int_to_ptr.vmem [resolvable:$true] %s264
      %270 = dma.vmem_to_hbm [thread:$0]  %s265, 128, %s5, [#allocation4], 64, 64, 4
    $region37: #{tpu_custom_call.1} parent=1 // pred_fallthru
      _
    // Predicated region
    $region38: #{tpu_custom_call.1} parent=1 // pred_check
      _
    $region39: #{tpu_custom_call.1} parent=1 // pred_check_branch
      %272 = sbr.rel (0) target = $region41
    $region40: #{tpu_custom_call.1} parent=1 // pred_region
      %273 = dma.done [#allocation4], 128
    $region41: #{tpu_custom_call.1} parent=1 // pred_fallthru
      _
    %274 = vsyncpa [#allocation3], 1
    %275 = vsyncpa [#allocation6], 1
    %276 = vsyncpa [#allocation4], 1

</llo_original>
